<compile_context>
chip_gen: v7x
topology: tpu7x:2x2x1
jax: 0.10.0
libtpu: 0.0.40
codegen_flags: <defaults>
</compile_context>

<pallas_src>
import functools

import jax
import jax.numpy as jnp
from jax.experimental import pallas as pl
from jax.experimental.pallas import tpu as pltpu


def _l2sim_kernel(x_ref, gt_ref, xsq_ref, gsq_ref, o_ref, acc_ref):
    # x_ref:   (tb, tk)   query rows, k-th contraction slab
    # gt_ref:  (tk, tg)   gts, pre-transposed, k-th contraction slab
    # xsq_ref: (tb, 1)    precomputed ||x||^2 (f32)
    # gsq_ref: (1, tg)    precomputed ||g||^2 (f32)
    # o_ref:   (tb, tg)   output logits tile (resident across k)
    # acc_ref: (tb, tg)   f32 cross-term accumulator (VMEM scratch)
    k = pl.program_id(2)

    @pl.when(k == 0)
    def _init():
        acc_ref[...] = jnp.zeros_like(acc_ref)

    # MXU: cross term x @ g^T with f32 accumulation.
    acc_ref[...] += jnp.dot(
        x_ref[...], gt_ref[...], preferred_element_type=jnp.float32
    )

    @pl.when(k == pl.num_programs(2) - 1)
    def _finalize():
        # Rank-1 norm corrections (VPU) + sqrt (EUP) only once per output tile.
        d2 = xsq_ref[...] + gsq_ref[...] - 2.0 * acc_ref[...]
        d2 = jnp.maximum(d2, 0.0)  # cancellation guard
        o_ref[...] = (-jnp.sqrt(d2)).astype(o_ref.dtype)


def _round_up(a: int, m: int) -> int:
    return (a + m - 1) // m * m


class L2Similarity:
    """Pallas equivalent of the PyTorch module; gts preprocessing is cached."""

    def __init__(self, gts: jax.Array, *, tg: int = 256, tk: int = 2048,
                 tb: int = 256, use_bf16_matmul: bool = False):
        G, D = gts.shape
        self.G, self.D = G, D
        self.tb_max = tb
        self.use_bf16_matmul = use_bf16_matmul

        # Tile sizes that depend only on gts (known at init).
        self.tg = min(tg, _round_up(G, 128))
        Dp = _round_up(D, 128)
        self.tk = min(tk, Dp)
        self.Gp = _round_up(G, self.tg)
        self.Kp = _round_up(Dp, self.tk)

        # --- cached, one-time gts preprocessing (hoisted off the call path) ---
        mm_dtype = jnp.bfloat16 if use_bf16_matmul else gts.dtype
        gts_t = jnp.zeros((self.Kp, self.Gp), mm_dtype)
        self.gts_t = gts_t.at[:D, :G].set(gts.T.astype(mm_dtype))       # (Kp, Gp)

        gsq = jnp.sum(gts.astype(jnp.float32) ** 2, axis=-1)            # (G,)
        self.gsq = jnp.zeros((1, self.Gp), jnp.float32).at[0, :G].set(gsq)

    def __call__(self, image_features: jax.Array) -> jax.Array:
        B, D = image_features.shape
        assert D == self.D, "feature dims must match"
        out_dtype = image_features.dtype

        # bf16 output -> native (16,128) store tile; f32 -> (8,128).
        sub = 16 if out_dtype == jnp.bfloat16 else 8
        tb = min(self.tb_max, _round_up(B, sub))
        Bp = _round_up(B, tb)
        tg, tk, Gp, Kp = self.tg, self.tk, self.Gp, self.Kp

        mm_dtype = jnp.bfloat16 if self.use_bf16_matmul else image_features.dtype

        # Zero-pad x (exact for this formulation; pad region sliced off).
        x = jnp.zeros((Bp, Kp), mm_dtype).at[:B, :D].set(
            image_features.astype(mm_dtype))

        # Precompute ||x||^2 once in f32 (was recomputed per G-tile in-kernel).
        xsq = jnp.sum(image_features.astype(jnp.float32) ** 2, axis=-1)  # (B,)
        xsq = jnp.zeros((Bp, 1), jnp.float32).at[:B, 0].set(xsq)

        # Explicit VMEM budget: double-buffered input/output tiles + accumulator.
        x_item = jnp.dtype(mm_dtype).itemsize
        o_item = jnp.dtype(out_dtype).itemsize
        est = (2 * (tb * tk * x_item + tk * tg * x_item + tb * tg * o_item
                    + tb * 4 + tg * 4)
               + tb * tg * 4)
        vmem_limit = min(max(2 * est, 32 << 20), 48 << 20)

        out = pl.pallas_call(
            _l2sim_kernel,
            out_shape=jax.ShapeDtypeStruct((Bp, Gp), out_dtype),
            grid_spec=pltpu.PrefetchScalarGridSpec(
                num_scalar_prefetch=0,
                # G-tiles outermost (gts slab resident across the B sweep when
                # Kp//tk == 1), B-tiles next, contraction axis innermost.
                grid=(Gp // tg, Bp // tb, Kp // tk),
                in_specs=[
                    pl.BlockSpec((tb, tk), lambda j, i, k: (i, k)),   # x slab
                    pl.BlockSpec((tk, tg), lambda j, i, k: (k, j)),   # gts^T slab
                    pl.BlockSpec((tb, 1), lambda j, i, k: (i, 0)),    # ||x||^2
                    pl.BlockSpec((1, tg), lambda j, i, k: (0, j)),    # ||g||^2
                ],
                out_specs=pl.BlockSpec((tb, tg), lambda j, i, k: (i, j)),
                scratch_shapes=[pltpu.VMEM((tb, tg), jnp.float32)],
            ),
            compiler_params=pltpu.CompilerParams(
                dimension_semantics=("parallel", "parallel", "arbitrary"),
                vmem_limit_bytes=int(vmem_limit),
            ),
        )(x, self.gts_t, xsq, self.gsq)

        return out[:B, :self.G]


def l2_similarity(image_features: jax.Array, gts: jax.Array, **kwargs) -> jax.Array:
    """Functional convenience wrapper (no caching of gts preprocessing)."""
    return L2Similarity(gts, **kwargs)(image_features)


if __name__ == "__main__":
    key = jax.random.PRNGKey(0)
    k_gts, k_x = jax.random.split(key)

    B, G, D = 16, 128, 64   # small shapes consistent with the module

    # Deterministic "registered buffer" gts and input features.
    gts = jax.random.normal(k_gts, (G, D), dtype=jnp.float32)
    image_features = jax.random.normal(k_x, (B, D), dtype=jnp.float32)

    module = L2Similarity(gts)          # gts transpose/pad/||g||^2 cached here
    logits = module(image_features)
    logits = jax.block_until_ready(logits)

    # Pure-JAX reference mirroring the PyTorch forward.
    ref = -jnp.sqrt(
        jnp.sum((image_features[:, None, :] - gts[None, :, :]) ** 2, axis=-1)
    )

    assert logits.shape == (B, G)
    assert logits.dtype == image_features.dtype
    assert jnp.allclose(logits, ref, atol=1e-4, rtol=1e-5), "mismatch vs reference"

    print("KERNEL_OK")
</pallas_src>

<mosaic_0001>
module attributes {stable_mosaic.version = 11 : i64} {
  func.func @_l2sim_kernel(%arg0: i32, %arg1: i32, %arg2: i32, %arg3: memref<16x128xf32, #tpu.memory_space<vmem>>, %arg4: memref<128x128xf32, #tpu.memory_space<vmem>>, %arg5: memref<16x1xf32, #tpu.memory_space<vmem>>, %arg6: memref<1x128xf32, #tpu.memory_space<vmem>>, %arg7: memref<16x128xf32, #tpu.memory_space<vmem>>, %arg8: memref<16x128xf32, #tpu.memory_space<vmem>>) attributes {dimension_semantics = [#tpu.dimension_semantics<parallel>, #tpu.dimension_semantics<parallel>, #tpu.dimension_semantics<arbitrary>], iteration_bounds = array<i64: 1, 1, 1>, scalar_prefetch = 0 : i64, scratch_operands = 1 : i64, tpu.core_type = #tpu.core_type<tc>, window_params = [{transform_indices = @transform_0, window_bounds = array<i64: 16, 128>}, {transform_indices = @transform_1, window_bounds = array<i64: 128, 128>}, {transform_indices = @transform_2, window_bounds = array<i64: 16, 1>}, {transform_indices = @transform_3, window_bounds = array<i64: 1, 128>}, {transform_indices = @transform_4, window_bounds = array<i64: 16, 128>}]} {
    %c0_i32 = arith.constant 0 : i32
    %0 = arith.cmpi eq, %arg2, %c0_i32 : i32
    %1 = arith.extui %0 : i1 to i32
    %c0_i32_0 = arith.constant 0 : i32
    %2 = arith.cmpi ne, %1, %c0_i32_0 : i32
    scf.if %2 {
      %cst_10 = arith.constant 0.000000e+00 : f32
      %12 = vector.broadcast %cst_10 : f32 to vector<16x128xf32>
      %c0_11 = arith.constant 0 : index
      %c0_12 = arith.constant 0 : index
      %13 = vector.load %arg8[%c0_11, %c0_12] : memref<16x128xf32, #tpu.memory_space<vmem>>, vector<16x128xf32>
      tpu.vector_store %arg8[%c0_11, %c0_12], %12 {strides = array<i32>} : memref<16x128xf32, #tpu.memory_space<vmem>>, vector<16x128xf32>,
    } else {
    }
    %c0 = arith.constant 0 : index
    %c0_1 = arith.constant 0 : index
    %3 = vector.load %arg8[%c0, %c0_1] : memref<16x128xf32, #tpu.memory_space<vmem>>, vector<16x128xf32>
    %c0_2 = arith.constant 0 : index
    %c0_3 = arith.constant 0 : index
    %4 = vector.load %arg3[%c0_2, %c0_3] : memref<16x128xf32, #tpu.memory_space<vmem>>, vector<16x128xf32>
    %c0_4 = arith.constant 0 : index
    %c0_5 = arith.constant 0 : index
    %5 = vector.load %arg4[%c0_4, %c0_5] : memref<128x128xf32, #tpu.memory_space<vmem>>, vector<128x128xf32>
    %cst = arith.constant dense<0.000000e+00> : vector<16x128xf32>
    %6 = tpu.matmul %4, %5, %cst {dimension_numbers = #tpu.dot_dimension_numbers<[1], [0], [0], [1], [0, 0, 1, 1], [], []>} : vector<16x128xf32>, vector<128x128xf32>, vector<16x128xf32> -> vector<16x128xf32>
    %7 = arith.addf %3, %6 : vector<16x128xf32>
    %c0_6 = arith.constant 0 : index
    %c0_7 = arith.constant 0 : index
    %8 = vector.load %arg8[%c0_6, %c0_7] : memref<16x128xf32, #tpu.memory_space<vmem>>, vector<16x128xf32>
    tpu.vector_store %arg8[%c0_6, %c0_7], %7 {strides = array<i32>} : memref<16x128xf32, #tpu.memory_space<vmem>>, vector<16x128xf32>,
    %c0_i32_8 = arith.constant 0 : i32
    %9 = arith.cmpi eq, %arg2, %c0_i32_8 : i32
    %10 = arith.extui %9 : i1 to i32
    %c0_i32_9 = arith.constant 0 : i32
    %11 = arith.cmpi ne, %10, %c0_i32_9 : i32
    scf.if %11 {
      %c0_10 = arith.constant 0 : index
      %c0_11 = arith.constant 0 : index
      %12 = vector.load %arg5[%c0_10, %c0_11] : memref<16x1xf32, #tpu.memory_space<vmem>>, vector<16x1xf32>
      %c0_12 = arith.constant 0 : index
      %c0_13 = arith.constant 0 : index
      %13 = vector.load %arg6[%c0_12, %c0_13] : memref<1x128xf32, #tpu.memory_space<vmem>>, vector<1x128xf32>
      %14 = vector.broadcast %12 : vector<16x1xf32> to vector<16x128xf32>
      %15 = vector.broadcast %13 : vector<1x128xf32> to vector<16x128xf32>
      %16 = arith.addf %14, %15 : vector<16x128xf32>
      %c0_14 = arith.constant 0 : index
      %c0_15 = arith.constant 0 : index
      %17 = vector.load %arg8[%c0_14, %c0_15] : memref<16x128xf32, #tpu.memory_space<vmem>>, vector<16x128xf32>
      %cst_16 = arith.constant 2.000000e+00 : f32
      %18 = vector.broadcast %cst_16 : f32 to vector<16x128xf32>
      %19 = arith.mulf %18, %17 : vector<16x128xf32>
      %20 = arith.subf %16, %19 : vector<16x128xf32>
      %cst_17 = arith.constant 0.000000e+00 : f32
      %21 = vector.broadcast %cst_17 : f32 to vector<16x128xf32>
      %22 = arith.maximumf %20, %21 : vector<16x128xf32>
      %23 = math.sqrt %22 : vector<16x128xf32>
      %cst_18 = arith.constant 0.000000e+00 : f32
      %24 = vector.broadcast %cst_18 : f32 to vector<16x128xf32>
      %25 = arith.subf %24, %23 : vector<16x128xf32>
      %c0_19 = arith.constant 0 : index
      %c0_20 = arith.constant 0 : index
      %26 = vector.load %arg7[%c0_19, %c0_20] : memref<16x128xf32, #tpu.memory_space<vmem>>, vector<16x128xf32>
      tpu.vector_store %arg7[%c0_19, %c0_20], %25 {strides = array<i32>} : memref<16x128xf32, #tpu.memory_space<vmem>>, vector<16x128xf32>,
    } else {
    }
    return
  }
  func.func @transform_0(%arg0: i32, %arg1: i32, %arg2: i32) -> (i32, i32) {
    %c0_i32 = arith.constant 0 : i32
    return %arg1, %arg2 : i32, i32
  }
  func.func @transform_1(%arg0: i32, %arg1: i32, %arg2: i32) -> (i32, i32) {
    %c0_i32 = arith.constant 0 : i32
    return %arg2, %arg0 : i32, i32
  }
  func.func @transform_2(%arg0: i32, %arg1: i32, %arg2: i32) -> (i32, i32) {
    %c0_i32 = arith.constant 0 : i32
    %c0_i32_0 = arith.constant 0 : i32
    return %arg1, %c0_i32 : i32, i32
  }
  func.func @transform_3(%arg0: i32, %arg1: i32, %arg2: i32) -> (i32, i32) {
    %c0_i32 = arith.constant 0 : i32
    %c0_i32_0 = arith.constant 0 : i32
    return %c0_i32, %arg0 : i32, i32
  }
  func.func @transform_4(%arg0: i32, %arg1: i32, %arg2: i32) -> (i32, i32) {
    %c0_i32 = arith.constant 0 : i32
    return %arg1, %arg0 : i32, i32
  }
}

</mosaic_0001>

<llo_original>
// kernel: tpu_custom_call.1
$region0: #{tpu_custom_call.1}
  #allocation0 [shape = 'u32[]', space=smem, size = 0x4, offset = 0x4, fixed_abs, tag = 'smem constant byte address 0x4 - core index']
  #allocation1 [shape = 'u32[144,128]{1,0:T(1,128)}', space=vmem, size = 0x12000, scoped, tag = 'internal scratch']
  #allocation2 [shape = 'f32[16,128]{1,0:T(8,128)}', space=vmem, size = 0x2000, scoped, tag = 'scratch operand']
  %s0 = inlined_call_operand.vmem [shape: f32[16,128], index: 0, kind: input, shape index: {}]
  %s1 = inlined_call_operand.hbm [shape: f32[128,128], index: 1, kind: input, shape index: {}]
  %s2 = inlined_call_operand.vmem [shape: f32[16,1], index: 2, kind: input, shape index: {}]
  %s3 = inlined_call_operand.vmem [shape: f32[1,128], index: 3, kind: input, shape index: {}]
  %s4 = inlined_call_operand.hbm [shape: f32[16,128], index: 4, kind: output, shape index: {}]
  %s5 = sld [smem:[#allocation0]]
  $region38: #{tpu_custom_call.1} parent=0
    _
  %s7 = ssub.s32 1, %s5
  %s8 = scalar_select 0, %s7, %s5
  $region1: #{tpu_custom_call.1} parent=0
    #allocation3 [shape = 'u8[65536]{0}', space=vmem, size = 0x10000, scoped, tag = 'input window, operand 1, single buffered']
    #allocation4 [shape = 's32[1]{0}', space=sflag, size = 0x4, scoped, tag = 'scoped memory for tpu_custom_call.1']
    #allocation5 [shape = 's32[1]{0}', space=sflag, size = 0x4, scoped, tag = 'scoped memory for tpu_custom_call.1']
    #allocation6 [shape = 'u8[8192]{0}', space=vmem, size = 0x2000, scoped, tag = 'output window, operand 0, single buffered']
    %9 = vsyncpa [#allocation4], 0
    %10 = vsyncpa [#allocation5], 0
    // Predicated region
    $region2: #{tpu_custom_call.1} parent=1 // pred_check
      _
    $region3: #{tpu_custom_call.1} parent=1 // pred_check_branch
      %12 = sbr.rel (0) target = $region5
    $region4: #{tpu_custom_call.1} parent=1 // pred_region
      _
    $region5: #{tpu_custom_call.1} parent=1 // pred_fallthru
      _
    // Predicated region
    $region6: #{tpu_custom_call.1} parent=1 // pred_check
      _
    $region7: #{tpu_custom_call.1} parent=1 // pred_check_branch
      %14 = sbr.rel (0) target = $region9
    $region8: #{tpu_custom_call.1} parent=1 // pred_region
      %s16 = ssub.s32 2048, 2048
      %17 = vsyncadd [#allocation4], %s16
      %s18 = sshll.u32 [#allocation3], 4
      %s19 = int_to_ptr.vmem [resolvable:$true] %s18
      %24 = dma.hbm_to_vmem [thread:$0]  %s1, 2048, %s19, [#allocation4], 128, 128, 8
    $region9: #{tpu_custom_call.1} parent=1 // pred_fallthru
      _
    // Predicated region
    $region10: #{tpu_custom_call.1} parent=1 // pred_check
      _
    $region11: #{tpu_custom_call.1} parent=1 // pred_check_branch
      %26 = sbr.rel (0) target = $region13
    $region12: #{tpu_custom_call.1} parent=1 // pred_region
      _
    $region13: #{tpu_custom_call.1} parent=1 // pred_fallthru
      _
    // Predicated region
    $region14: #{tpu_custom_call.1} parent=1 // pred_check
      _
    $region15: #{tpu_custom_call.1} parent=1 // pred_check_branch
      %28 = sbr.rel (0) target = $region17
    $region16: #{tpu_custom_call.1} parent=1 // pred_region
      _
    $region17: #{tpu_custom_call.1} parent=1 // pred_fallthru
      _
    // Predicated region
    $region18: #{tpu_custom_call.1} parent=1 // pred_check
      _
    $region19: #{tpu_custom_call.1} parent=1 // pred_check_branch
      %30 = sbr.rel (0) target = $region21
    $region20: #{tpu_custom_call.1} parent=1 // pred_region
      %31 = dma.done [#allocation4], 2048
    $region21: #{tpu_custom_call.1} parent=1 // pred_fallthru
      _
    %p32 = scmp.eq.s32.totalorder 0, 0
    // Predicated region
    $region22: #{tpu_custom_call.1} parent=1 // pred_check
      %p33 = pneg %p32
    $region23: #{tpu_custom_call.1} parent=1 // pred_check_branch
      %35 = sbr.rel (%p33) target = $region25
    $region24: #{tpu_custom_call.1} parent=1 // pred_region
      %36 = vst [vmem:[#allocation2] sm:$0xff] 0.0
      %37 = vst [vmem:[#allocation2 + $0x8] sm:$0xff] 0.0
    $region25: #{tpu_custom_call.1} parent=1 // pred_fallthru
      _
    %v38 = vld [vmem:[#allocation2] sm:$0xff]
    %v39 = vld [vmem:[#allocation2 + $0x8] sm:$0xff]
    %v40 = vld [vmem:[%s0] sm:$0xff]
    %v41 = vld [vmem:[%s0 + $0x8] sm:$0xff]
    %v42 = vld [vmem:[#allocation3] sm:$0xff]
    %v43 = vld [vmem:[#allocation3 + $0x8] sm:$0xff]
    %v44 = vld [vmem:[#allocation3 + $0x10] sm:$0xff]
    %v45 = vld [vmem:[#allocation3 + $0x18] sm:$0xff]
    %v46 = vld [vmem:[#allocation3 + $0x20] sm:$0xff]
    %v47 = vld [vmem:[#allocation3 + $0x28] sm:$0xff]
    %v48 = vld [vmem:[#allocation3 + $0x30] sm:$0xff]
    %v49 = vld [vmem:[#allocation3 + $0x38] sm:$0xff]
    %v50 = vld [vmem:[#allocation3 + $0x40] sm:$0xff]
    %v51 = vld [vmem:[#allocation3 + $0x48] sm:$0xff]
    %v52 = vld [vmem:[#allocation3 + $0x50] sm:$0xff]
    %v53 = vld [vmem:[#allocation3 + $0x58] sm:$0xff]
    %v54 = vld [vmem:[#allocation3 + $0x60] sm:$0xff]
    %v55 = vld [vmem:[#allocation3 + $0x68] sm:$0xff]
    %v56 = vld [vmem:[#allocation3 + $0x70] sm:$0xff]
    %v57 = vld [vmem:[#allocation3 + $0x78] sm:$0xff]
    %58 = vmatprep.subr.mxu0 0.0
    %59 = vmatpush1.msra.mxu0 %v42
    %60 = vmatprep.subr.mxu0 0.0
    %61 = vmatpush1.msra.mxu0 %v43
    %62 = vmatprep.subr.mxu0 0.0
    %63 = vmatpush1.msra.mxu0 %v44
    %64 = vmatprep.subr.mxu0 0.0
    %65 = vmatpush1.msra.mxu0 %v45
    %66 = vmatprep.subr.mxu0 0.0
    %67 = vmatpush1.msra.mxu0 %v46
    %68 = vmatprep.subr.mxu0 0.0
    %69 = vmatpush1.msra.mxu0 %v47
    %70 = vmatprep.subr.mxu0 0.0
    %71 = vmatpush1.msra.mxu0 %v48
    %72 = vmatprep.subr.mxu0 0.0
    %73 = vmatpush1.msra.mxu0 %v49
    %74 = vmatprep.subr.mxu0 0.0
    %75 = vmatpush1.msra.mxu0 %v50
    %76 = vmatprep.subr.mxu0 0.0
    %77 = vmatpush1.msra.mxu0 %v51
    %78 = vmatprep.subr.mxu0 0.0
    %79 = vmatpush1.msra.mxu0 %v52
    %80 = vmatprep.subr.mxu0 0.0
    %81 = vmatpush1.msra.mxu0 %v53
    %82 = vmatprep.subr.mxu0 0.0
    %83 = vmatpush1.msra.mxu0 %v54
    %84 = vmatprep.subr.mxu0 0.0
    %85 = vmatpush1.msra.mxu0 %v55
    %86 = vmatprep.subr.mxu0 0.0
    %87 = vmatpush1.msra.mxu0 %v56
    %88 = vmatprep.subr.mxu0 0.0
    %89 = vmatpush1.msra.mxu0 %v57
    %90 = vmatprep.subr.mxu0 0.0
    %91 = vmatpush1.msra.mxu0 0.0
    %92 = vmatprep.subr.mxu0 0.0
    %93 = vmatpush1.msra.mxu0 0.0
    %94 = vmatprep.subr.mxu0 0.0
    %95 = vmatpush1.msra.mxu0 0.0
    %96 = vmatprep.subr.mxu0 0.0
    %97 = vmatpush1.msra.mxu0 0.0
    %98 = vmatprep.subr.mxu0 0.0
    %99 = vmatpush1.msra.mxu0 0.0
    %100 = vmatprep.subr.mxu0 0.0
    %101 = vmatpush1.msra.mxu0 0.0
    %102 = vmatprep.subr.mxu0 0.0
    %103 = vmatpush1.msra.mxu0 0.0
    %104 = vmatprep.subr.mxu0 0.0
    %105 = vmatpush1.msra.mxu0 0.0
    %106 = vmatprep.subr.mxu0 0.0
    %107 = vmatpush1.msra.mxu0 0.0
    %108 = vmatprep.subr.mxu0 0.0
    %109 = vmatpush1.msra.mxu0 0.0
    %110 = vmatprep.subr.mxu0 0.0
    %111 = vmatpush1.msra.mxu0 0.0
    %112 = vmatprep.subr.mxu0 0.0
    %113 = vmatpush1.msra.mxu0 0.0
    %114 = vmatprep.subr.mxu0 0.0
    %115 = vmatpush1.msra.mxu0 0.0
    %116 = vmatprep.subr.mxu0 0.0
    %117 = vmatpush1.msra.mxu0 0.0
    %118 = vmatprep.subr.mxu0 0.0
    %119 = vmatpush1.msra.mxu0 0.0
    %120 = vmatprep.subr.mxu0 0.0
    %121 = vmatpush1.msra.mxu0 0.0
    %122 = vmatprep.mubr.f32.mxu0 0.0
    %123 = vmatmul.mubr.f32.gmra.mrb[0].mxu0 %v40
    %v124 = vpop.f32.mrb[0].mxu0
    %v125 = vadd.f32 0.0, %v124
    %v126 = vpop.f32.mrb[0].mxu0
    %127 = vmatprep.mubr.f32.mxu0 0.0
    %128 = vmatmul.mubr.f32.gmra.mrb[0].mxu0 %v41
    %v129 = vpop.f32.mrb[0].mxu0
    %v130 = vadd.f32 0.0, %v129
    %v131 = vpop.f32.mrb[0].mxu0
    %132 = vdwg.mxu0
    %v133 = vadd.f32 %v38, %v125
    %v134 = vadd.f32 %v39, %v130
    %135 = vst [vmem:[#allocation2] sm:$0xff] %v133
    %136 = vst [vmem:[#allocation2 + $0x8] sm:$0xff] %v134
    // Predicated region
    $region26: #{tpu_custom_call.1} parent=1 // pred_check
      %p137 = pneg %p32
    $region27: #{tpu_custom_call.1} parent=1 // pred_check_branch
      %139 = sbr.rel (%p137) target = $region29
    $region28: #{tpu_custom_call.1} parent=1 // pred_region
      %v140 = vld [vmem:[%s2] sm:$0xff]
      %v141 = vld [vmem:[%s2 + $0x8] sm:$0xff]
      %v142 = vld [vmem:[%s3] sm:$0x1]
      %144 = vset.pattern.permute.xlu0 0
      %145 = vperm.xlu0 %144, %v140
      %v146 = vpop.permute.xlu0 %145
      %149 = vset.pattern.permute.xlu0 0
      %150 = vperm.xlu0 %149, %v141
      %v151 = vpop.permute.xlu0 %150
      %v154 = vlaneseq
      %v155 = vshrl.u32 %v154, 7
      %v156 = vsub.s32 0, %v155
      %v157 = vrot.slane %v142, %v156
      %v159 = vadd.f32 %v146, %v157
      %v160 = vadd.f32 %v151, %v157
      %v161 = vld [vmem:[#allocation2] sm:$0xff]
      %v162 = vld [vmem:[#allocation2 + $0x8] sm:$0xff]
      %v163 = vmul.f32 %v161, 2.0
      %v164 = vmul.f32 %v162, 2.0
      %v165 = vsub.f32 %v159, %v163
      %v166 = vsub.f32 %v160, %v164
      %v167 = vmax.f32 %v165, 0.0
      %v168 = vmax.f32 %v166, 0.0
      %v169 = vrsqrt.pop %v167
      %v170 = vmul.f32 %v167, %v169
      %vm171 = vcmp.eq.f32.partialorder %v167, inf
      %v172 = vsel %vm171, %v167, %v170
      %vm173 = vcmp.eq.f32.partialorder %v167, 0.0
      %v174 = vand.u32 %v167, 2147483648
      %v175 = vsel %vm173, %v174, %v172
      %v176 = vrsqrt.pop %v168
      %v177 = vmul.f32 %v168, %v176
      %vm178 = vcmp.eq.f32.partialorder %v168, inf
      %v179 = vsel %vm178, %v168, %v177
      %vm180 = vcmp.eq.f32.partialorder %v168, 0.0
      %v181 = vand.u32 %v168, 2147483648
      %v182 = vsel %vm180, %v181, %v179
      %v183 = vsub.f32 0.0, %v175
      %v184 = vsub.f32 0.0, %v182
      %185 = vst [vmem:[#allocation6] sm:$0xff] %v183
      %186 = vst [vmem:[#allocation6 + $0x8] sm:$0xff] %v184
    $region29: #{tpu_custom_call.1} parent=1 // pred_fallthru
      _
    // Predicated region
    $region30: #{tpu_custom_call.1} parent=1 // pred_check
      _
    $region31: #{tpu_custom_call.1} parent=1 // pred_check_branch
      %188 = sbr.rel (0) target = $region33
    $region32: #{tpu_custom_call.1} parent=1 // pred_region
      %s190 = ssub.s32 256, 256
      %191 = vsyncadd [#allocation5], %s190
      %s192 = sshll.u32 [#allocation6], 4
      %s193 = int_to_ptr.vmem [resolvable:$true] %s192
      %198 = dma.vmem_to_hbm [thread:$0]  %s193, 256, %s4, [#allocation5], 128, 128, 8
    $region33: #{tpu_custom_call.1} parent=1 // pred_fallthru
      _
    // Predicated region
    $region34: #{tpu_custom_call.1} parent=1 // pred_check
      _
    $region35: #{tpu_custom_call.1} parent=1 // pred_check_branch
      %200 = sbr.rel (0) target = $region37
    $region36: #{tpu_custom_call.1} parent=1 // pred_region
      %201 = dma.done [#allocation5], 256
    $region37: #{tpu_custom_call.1} parent=1 // pred_fallthru
      _
    %202 = vsyncpa [#allocation4], 1
    %203 = vsyncpa [#allocation5], 1

</llo_original>
